<compile_context>
chip_gen: v7x
topology: tpu7x:2x2x1
jax: 0.10.0
libtpu: 0.0.40
codegen_flags: <defaults>
</compile_context>

<pallas_src>
import math
import functools

import jax
import jax.numpy as jnp
from jax import lax
from jax.experimental import pallas as pl
from jax.experimental.pallas import tpu as pltpu


def _attention_block(scale, q, k, v, keep_mask, keep_scale):
    """Batched SDPA on resident VMEM tiles.

    q: (Hb, Sq, D), k/v: (Hb, Sk, D), keep_mask: (Hb, Sq, Sk) bool or None.
    """
    # scores = (q * 1/sqrt(D)) @ k^T, batched over heads, no explicit transpose.
    s = lax.dot_general(
        q * scale, k,
        dimension_numbers=(((2,), (2,)), ((0,), (0,))),
        preferred_element_type=jnp.float32,
    )
    # Numerically-stable softmax over the last dim.
    m = jnp.max(s, axis=-1, keepdims=True)
    e = jnp.exp(s - m)
    denom = jnp.sum(e, axis=-1, keepdims=True)          # (Hb, Sq, 1)
    # Normalization and dropout keep-scale folded into one small per-row
    # column; the only full-tile elementwise op left is one broadcast multiply.
    inv = keep_scale / denom
    if keep_mask is not None:
        e = jnp.where(keep_mask, e, 0.0)
    p = e * inv
    # output = dropout(softmax(qk)) @ v, batched over heads.
    return lax.dot_general(
        p, v,
        dimension_numbers=(((2,), (1,)), ((0,), (0,))),
        preferred_element_type=jnp.float32,
    )


def _sdpa_kernel(scale, q_ref, k_ref, v_ref, o_ref):
    o = _attention_block(scale, q_ref[...], k_ref[...], v_ref[...], None, 1.0)
    o_ref[...] = o.astype(o_ref.dtype)


def _sdpa_dropout_kernel(scale, dropout_p, q_ref, k_ref, v_ref, bits_ref, o_ref):
    # Integer-space keep test: keep iff bits >= p * 2^32 (one compare + select,
    # no shift / int->float convert / 2^-24 multiply).
    thresh = jnp.uint32(min(int(round(dropout_p * (1 << 32))), (1 << 32) - 1))
    keep = bits_ref[...] >= thresh
    o = _attention_block(scale, q_ref[...], k_ref[...], v_ref[...],
                         keep, 1.0 / (1.0 - dropout_p))
    o_ref[...] = o.astype(o_ref.dtype)


def sdpa_pallas(query, key, value, *, dropout_p=0.0, rng_key=None, h_block=None):
    """query/key/value: [B, H, S, D]; returns [B, H, Sq, D]."""
    B, H, Sq, D = query.shape
    Bk, Hk, Sk, Dk = key.shape
    assert (Bk, Hk, Dk) == (B, H, D) and value.shape == key.shape
    BH = B * H
    if h_block is None:
        h_block = BH                      # all heads in a single grid step
    assert BH % h_block == 0
    G = BH // h_block

    q = query.reshape(BH, Sq, D)
    k = key.reshape(BH, Sk, D)
    v = value.reshape(BH, Sk, D)
    scale = 1.0 / math.sqrt(D)

    in_specs = [
        pl.BlockSpec((h_block, Sq, D), lambda g: (g, 0, 0)),
        pl.BlockSpec((h_block, Sk, D), lambda g: (g, 0, 0)),
        pl.BlockSpec((h_block, Sk, D), lambda g: (g, 0, 0)),
    ]
    args = [q, k, v]

    if dropout_p > 0.0:
        if rng_key is None:
            rng_key = jax.random.PRNGKey(0)
        # Random bits generated outside the kernel (works on-device and under
        # the TPU interpreter; in-kernel pltpu.prng_seed does not lower on CPU).
        bits = jax.random.bits(rng_key, (BH, Sq, Sk), dtype=jnp.uint32)
        in_specs.append(pl.BlockSpec((h_block, Sq, Sk), lambda g: (g, 0, 0)))
        args.append(bits)
        kernel = functools.partial(_sdpa_dropout_kernel, scale, float(dropout_p))
    else:
        kernel = functools.partial(_sdpa_kernel, scale)

    # TODO: for production sequence lengths (S >= 1k) replace the resident
    # (Sq, Sk) score tile with flash-style Sk tiling + online softmax and emit a
    # lane-dense (Sq, H*D) output slab; unnecessary at these tiny shapes.
    out = pl.pallas_call(
        kernel,
        out_shape=jax.ShapeDtypeStruct((BH, Sq, D), query.dtype),
        grid=(G,),
        in_specs=in_specs,
        out_specs=pl.BlockSpec((h_block, Sq, D), lambda g: (g, 0, 0)),
        compiler_params=pltpu.CompilerParams(
            dimension_semantics=("parallel",),
        ),
    )(*args)
    return out.reshape(B, H, Sq, D)


def sdpa_ref(query, key, value):
    d = query.shape[-1]
    s = jnp.einsum("bhqd,bhkd->bhqk", query, key) / math.sqrt(d)
    p = jax.nn.softmax(s, axis=-1)
    return jnp.einsum("bhqk,bhkd->bhqd", p, value)


if __name__ == "__main__":
    # Small shapes consistent with the module's attention semantics.
    B, H, Sq, Sk, D = 1, 4, 16, 16, 32
    k0, k1, k2 = jax.random.split(jax.random.PRNGKey(0), 3)
    query = jax.random.normal(k0, (B, H, Sq, D), dtype=jnp.float32)
    key = jax.random.normal(k1, (B, H, Sk, D), dtype=jnp.float32)
    value = jax.random.normal(k2, (B, H, Sk, D), dtype=jnp.float32)

    # Correctness check with dropout disabled (matches the reference).
    out_nodrop = sdpa_pallas(query, key, value, dropout_p=0.0)
    jax.block_until_ready(out_nodrop)
    ref = sdpa_ref(query, key, value)
    assert out_nodrop.shape == (B, H, Sq, D)
    assert jnp.allclose(out_nodrop, ref, atol=1e-4, rtol=1e-4), "mismatch vs reference"

    # Run with dropout enabled (deterministic via explicit RNG key).
    out_drop = sdpa_pallas(query, key, value, dropout_p=0.1,
                           rng_key=jax.random.PRNGKey(1234))
    jax.block_until_ready(out_drop)
    assert out_drop.shape == (B, H, Sq, D)
    assert bool(jnp.all(jnp.isfinite(out_drop)))

    print("KERNEL_OK")
</pallas_src>

<mosaic_0001>
module attributes {stable_mosaic.version = 11 : i64} {
  func.func @_sdpa_kernel(%arg0: i32, %arg1: memref<4x16x32xf32, #tpu.memory_space<vmem>>, %arg2: memref<4x16x32xf32, #tpu.memory_space<vmem>>, %arg3: memref<4x16x32xf32, #tpu.memory_space<vmem>>, %arg4: memref<4x16x32xf32, #tpu.memory_space<vmem>>) attributes {dimension_semantics = [#tpu.dimension_semantics<parallel>], iteration_bounds = array<i64: 1>, scalar_prefetch = 0 : i64, scratch_operands = 0 : i64, tpu.core_type = #tpu.core_type<tc>, window_params = [{transform_indices = @transform_0, window_bounds = array<i64: 4, 16, 32>}, {transform_indices = @transform_1, window_bounds = array<i64: 4, 16, 32>}, {transform_indices = @transform_2, window_bounds = array<i64: 4, 16, 32>}, {transform_indices = @transform_3, window_bounds = array<i64: 4, 16, 32>}]} {
    %c0 = arith.constant 0 : index
    %c0_0 = arith.constant 0 : index
    %c0_1 = arith.constant 0 : index
    %0 = vector.load %arg1[%c0, %c0_0, %c0_1] : memref<4x16x32xf32, #tpu.memory_space<vmem>>, vector<4x16x32xf32>
    %c0_2 = arith.constant 0 : index
    %c0_3 = arith.constant 0 : index
    %c0_4 = arith.constant 0 : index
    %1 = vector.load %arg2[%c0_2, %c0_3, %c0_4] : memref<4x16x32xf32, #tpu.memory_space<vmem>>, vector<4x16x32xf32>
    %c0_5 = arith.constant 0 : index
    %c0_6 = arith.constant 0 : index
    %c0_7 = arith.constant 0 : index
    %2 = vector.load %arg3[%c0_5, %c0_6, %c0_7] : memref<4x16x32xf32, #tpu.memory_space<vmem>>, vector<4x16x32xf32>
    %cst = arith.constant 0.176776692 : f32
    %3 = vector.broadcast %cst : f32 to vector<4x16x32xf32>
    %4 = arith.mulf %0, %3 : vector<4x16x32xf32>
    %cst_8 = arith.constant dense<0.000000e+00> : vector<4x16x16xf32>
    %5 = tpu.matmul %4, %1, %cst_8 {dimension_numbers = #tpu.dot_dimension_numbers<[2], [2], [1], [1], [0, 0, 0, 1, 1, 1], [0], [0]>} : vector<4x16x32xf32>, vector<4x16x32xf32>, vector<4x16x16xf32> -> vector<4x16x16xf32>
    %cst_9 = arith.constant dense<0xFF800000> : vector<4x16xf32>
    %6 = vector.multi_reduction <maximumf>, %5, %cst_9 [2] : vector<4x16x16xf32> to vector<4x16xf32>
    %7 = vector.shape_cast %6 : vector<4x16xf32> to vector<4x16x1xf32>
    %8 = vector.broadcast %7 : vector<4x16x1xf32> to vector<4x16x16xf32>
    %9 = arith.subf %5, %8 : vector<4x16x16xf32>
    %10 = math.exp %9 : vector<4x16x16xf32>
    %cst_10 = arith.constant dense<0.000000e+00> : vector<4x16xf32>
    %11 = vector.multi_reduction <add>, %10, %cst_10 [2] : vector<4x16x16xf32> to vector<4x16xf32>
    %12 = vector.shape_cast %11 : vector<4x16xf32> to vector<4x16x1xf32>
    %cst_11 = arith.constant 1.000000e+00 : f32
    %13 = vector.broadcast %cst_11 : f32 to vector<4x16x1xf32>
    %14 = arith.divf %13, %12 : vector<4x16x1xf32>
    %15 = vector.broadcast %14 : vector<4x16x1xf32> to vector<4x16x16xf32>
    %16 = arith.mulf %10, %15 : vector<4x16x16xf32>
    %cst_12 = arith.constant dense<0.000000e+00> : vector<4x16x32xf32>
    %17 = tpu.matmul %16, %2, %cst_12 {dimension_numbers = #tpu.dot_dimension_numbers<[2], [1], [1], [2], [0, 0, 0, 1, 1, 2], [0], [0]>} : vector<4x16x16xf32>, vector<4x16x32xf32>, vector<4x16x32xf32> -> vector<4x16x32xf32>
    %c0_13 = arith.constant 0 : index
    %c0_14 = arith.constant 0 : index
    %c0_15 = arith.constant 0 : index
    %18 = vector.load %arg4[%c0_13, %c0_14, %c0_15] : memref<4x16x32xf32, #tpu.memory_space<vmem>>, vector<4x16x32xf32>
    tpu.vector_store %arg4[%c0_13, %c0_14, %c0_15], %17 {strides = array<i32>} : memref<4x16x32xf32, #tpu.memory_space<vmem>>, vector<4x16x32xf32>,
    return
  }
  func.func @transform_0(%arg0: i32) -> (i32, i32, i32) {
    %c0_i32 = arith.constant 0 : i32
    %c0_i32_0 = arith.constant 0 : i32
    %c0_i32_1 = arith.constant 0 : i32
    return %arg0, %c0_i32, %c0_i32_0 : i32, i32, i32
  }
  func.func @transform_1(%arg0: i32) -> (i32, i32, i32) {
    %c0_i32 = arith.constant 0 : i32
    %c0_i32_0 = arith.constant 0 : i32
    %c0_i32_1 = arith.constant 0 : i32
    return %arg0, %c0_i32, %c0_i32_0 : i32, i32, i32
  }
  func.func @transform_2(%arg0: i32) -> (i32, i32, i32) {
    %c0_i32 = arith.constant 0 : i32
    %c0_i32_0 = arith.constant 0 : i32
    %c0_i32_1 = arith.constant 0 : i32
    return %arg0, %c0_i32, %c0_i32_0 : i32, i32, i32
  }
  func.func @transform_3(%arg0: i32) -> (i32, i32, i32) {
    %c0_i32 = arith.constant 0 : i32
    %c0_i32_0 = arith.constant 0 : i32
    %c0_i32_1 = arith.constant 0 : i32
    return %arg0, %c0_i32, %c0_i32_0 : i32, i32, i32
  }
}

</mosaic_0001>

<llo_original>
// kernel: tpu_custom_call.1
$region0: #{tpu_custom_call.1}
  #allocation0 [shape = 'u32[]', space=smem, size = 0x4, offset = 0x4, fixed_abs, tag = 'smem constant byte address 0x4 - core index']
  #allocation1 [shape = 'u32[144,128]{1,0:T(1,128)}', space=vmem, size = 0x12000, scoped, tag = 'internal scratch']
  %s0 = inlined_call_operand.hbm [shape: f32[4,16,32], index: 0, kind: input, shape index: {}]
  %s1 = inlined_call_operand.hbm [shape: f32[4,16,32], index: 1, kind: input, shape index: {}]
  %s2 = inlined_call_operand.hbm [shape: f32[4,16,32], index: 2, kind: input, shape index: {}]
  %s3 = inlined_call_operand.hbm [shape: f32[4,16,32], index: 3, kind: output, shape index: {}]
  %s4 = sld [smem:[#allocation0]]
  $region34: #{tpu_custom_call.1} parent=0
    _
  %s6 = ssub.s32 1, %s4
  %s7 = scalar_select 0, %s6, %s4
  $region1: #{tpu_custom_call.1} parent=0
    #allocation2 [shape = 'u8[32768]{0}', space=vmem, size = 0x8000, scoped, tag = 'input window, operand 0, single buffered']
    #allocation3 [shape = 's32[1]{0}', space=sflag, size = 0x4, scoped, tag = 'scoped memory for tpu_custom_call.1']
    #allocation4 [shape = 's32[1]{0}', space=sflag, size = 0x4, scoped, tag = 'scoped memory for tpu_custom_call.1']
    #allocation5 [shape = 'u8[32768]{0}', space=vmem, size = 0x8000, scoped, tag = 'input window, operand 1, single buffered']
    #allocation6 [shape = 's32[1]{0}', space=sflag, size = 0x4, scoped, tag = 'scoped memory for tpu_custom_call.1']
    #allocation7 [shape = 'u8[32768]{0}', space=vmem, size = 0x8000, scoped, tag = 'input window, operand 2, single buffered']
    #allocation8 [shape = 'u8[32768]{0}', space=vmem, size = 0x8000, scoped, tag = 'output window, operand 0, single buffered']
    %8 = vsyncpa [#allocation3], 0
    %9 = vsyncpa [#allocation6], 0
    %10 = vsyncpa [#allocation4], 0
    // Predicated region
    $region2: #{tpu_custom_call.1} parent=1 // pred_check
      _
    $region3: #{tpu_custom_call.1} parent=1 // pred_check_branch
      %12 = sbr.rel (0) target = $region5
    $region4: #{tpu_custom_call.1} parent=1 // pred_region
      %s14 = ssub.s32 1024, 1024
      %15 = vsyncadd [#allocation3], %s14
      %s16 = sshll.u32 [#allocation2], 4
      %s17 = int_to_ptr.vmem [resolvable:$true] %s16
      %22 = dma.hbm_to_vmem [thread:$0]  %s0, 1024, %s17, [#allocation3], 128, 128, 8
    $region5: #{tpu_custom_call.1} parent=1 // pred_fallthru
      _
    // Predicated region
    $region6: #{tpu_custom_call.1} parent=1 // pred_check
      _
    $region7: #{tpu_custom_call.1} parent=1 // pred_check_branch
      %24 = sbr.rel (0) target = $region9
    $region8: #{tpu_custom_call.1} parent=1 // pred_region
      %s26 = ssub.s32 1024, 1024
      %27 = vsyncadd [#allocation6], %s26
      %s28 = sshll.u32 [#allocation5], 4
      %s29 = int_to_ptr.vmem [resolvable:$true] %s28
      %34 = dma.hbm_to_vmem [thread:$0]  %s1, 1024, %s29, [#allocation6], 128, 128, 8
    $region9: #{tpu_custom_call.1} parent=1 // pred_fallthru
      _
    // Predicated region
    $region10: #{tpu_custom_call.1} parent=1 // pred_check
      _
    $region11: #{tpu_custom_call.1} parent=1 // pred_check_branch
      %36 = sbr.rel (0) target = $region13
    $region12: #{tpu_custom_call.1} parent=1 // pred_region
      %s38 = ssub.s32 1024, 1024
      %39 = vsyncadd [#allocation6], %s38
      %s40 = sshll.u32 [#allocation7], 4
      %s41 = int_to_ptr.vmem [resolvable:$true] %s40
      %46 = dma.hbm_to_vmem [thread:$0]  %s2, 1024, %s41, [#allocation6], 128, 128, 8
    $region13: #{tpu_custom_call.1} parent=1 // pred_fallthru
      _
    // Predicated region
    $region14: #{tpu_custom_call.1} parent=1 // pred_check
      _
    $region15: #{tpu_custom_call.1} parent=1 // pred_check_branch
      %48 = sbr.rel (0) target = $region17
    $region16: #{tpu_custom_call.1} parent=1 // pred_region
      %49 = dma.done [#allocation3], 1024
    $region17: #{tpu_custom_call.1} parent=1 // pred_fallthru
      _
    // Predicated region
    $region18: #{tpu_custom_call.1} parent=1 // pred_check
      _
    $region19: #{tpu_custom_call.1} parent=1 // pred_check_branch
      %51 = sbr.rel (0) target = $region21
    $region20: #{tpu_custom_call.1} parent=1 // pred_region
      %52 = dma.done [#allocation6], 1024
    $region21: #{tpu_custom_call.1} parent=1 // pred_fallthru
      _
    // Predicated region
    $region22: #{tpu_custom_call.1} parent=1 // pred_check
      _
    $region23: #{tpu_custom_call.1} parent=1 // pred_check_branch
      %54 = sbr.rel (0) target = $region25
    $region24: #{tpu_custom_call.1} parent=1 // pred_region
      %55 = dma.done [#allocation6], 1024
    $region25: #{tpu_custom_call.1} parent=1 // pred_fallthru
      _
    %v56 = vld [vmem:[#allocation2] sm:$0xff]
    %v57 = vld [vmem:[#allocation2 + $0x8] sm:$0xff]
    %v58 = vld [vmem:[#allocation2 + $0x10] sm:$0xff]
    %v59 = vld [vmem:[#allocation2 + $0x18] sm:$0xff]
    %v60 = vld [vmem:[#allocation2 + $0x20] sm:$0xff]
    %v61 = vld [vmem:[#allocation2 + $0x28] sm:$0xff]
    %v62 = vld [vmem:[#allocation2 + $0x30] sm:$0xff]
    %v63 = vld [vmem:[#allocation2 + $0x38] sm:$0xff]
    %v64 = vld [vmem:[#allocation5] sm:$0xff]
    %v65 = vld [vmem:[#allocation5 + $0x8] sm:$0xff]
    %v66 = vld [vmem:[#allocation5 + $0x10] sm:$0xff]
    %v67 = vld [vmem:[#allocation5 + $0x18] sm:$0xff]
    %v68 = vld [vmem:[#allocation5 + $0x20] sm:$0xff]
    %v69 = vld [vmem:[#allocation5 + $0x28] sm:$0xff]
    %v70 = vld [vmem:[#allocation5 + $0x30] sm:$0xff]
    %v71 = vld [vmem:[#allocation5 + $0x38] sm:$0xff]
    %v72 = vld [vmem:[#allocation7] sm:$0xff]
    %v73 = vld [vmem:[#allocation7 + $0x8] sm:$0xff]
    %v74 = vld [vmem:[#allocation7 + $0x10] sm:$0xff]
    %v75 = vld [vmem:[#allocation7 + $0x18] sm:$0xff]
    %v76 = vld [vmem:[#allocation7 + $0x20] sm:$0xff]
    %v77 = vld [vmem:[#allocation7 + $0x28] sm:$0xff]
    %v78 = vld [vmem:[#allocation7 + $0x30] sm:$0xff]
    %v79 = vld [vmem:[#allocation7 + $0x38] sm:$0xff]
    %v80 = vmul.f32 %v56, 0.17677669
    %v81 = vmul.f32 %v57, 0.17677669
    %v82 = vmul.f32 %v58, 0.17677669
    %v83 = vmul.f32 %v59, 0.17677669
    %v84 = vmul.f32 %v60, 0.17677669
    %v85 = vmul.f32 %v61, 0.17677669
    %v86 = vmul.f32 %v62, 0.17677669
    %v87 = vmul.f32 %v63, 0.17677669
    %vm88 = vcmask 261120
    %v90 = vsel %vm88, %v80, 0
    %v93 = vsel %vm88, %v81, 0
    %v96 = vsel %vm88, %v64, 0
    %v99 = vsel %vm88, %v65, 0
    %101 = vmatprep.subr.mxu0 0.0
    %102 = vmatpush1.xpose.msra.mxu0 %v96
    %103 = vmatprep.subr.mxu0 0.0
    %104 = vmatpush1.xpose.msra.mxu0 %v99
    %105 = vmatprep.subr.mxu0 0.0
    %106 = vmatpush1.xpose.msra.mxu0 0.0
    %107 = vmatprep.subr.mxu0 0.0
    %108 = vmatpush1.xpose.msra.mxu0 0.0
    %109 = vmatprep.subr.mxu0 0.0
    %110 = vmatpush1.xpose.msra.mxu0 0.0
    %111 = vmatprep.subr.mxu0 0.0
    %112 = vmatpush1.xpose.msra.mxu0 0.0
    %113 = vmatprep.subr.mxu0 0.0
    %114 = vmatpush1.xpose.msra.mxu0 0.0
    %115 = vmatprep.subr.mxu0 0.0
    %116 = vmatpush1.xpose.msra.mxu0 0.0
    %117 = vmatprep.subr.mxu0 0.0
    %118 = vmatpush1.xpose.msra.mxu0 0.0
    %119 = vmatprep.subr.mxu0 0.0
    %120 = vmatpush1.xpose.msra.mxu0 0.0
    %121 = vmatprep.subr.mxu0 0.0
    %122 = vmatpush1.xpose.msra.mxu0 0.0
    %123 = vmatprep.subr.mxu0 0.0
    %124 = vmatpush1.xpose.msra.mxu0 0.0
    %125 = vmatprep.subr.mxu0 0.0
    %126 = vmatpush1.xpose.msra.mxu0 0.0
    %127 = vmatprep.subr.mxu0 0.0
    %128 = vmatpush1.xpose.msra.mxu0 0.0
    %129 = vmatprep.subr.mxu0 0.0
    %130 = vmatpush1.xpose.msra.mxu0 0.0
    %131 = vmatprep.subr.mxu0 0.0
    %132 = vmatpush1.xpose.msra.mxu0 0.0
    %133 = vmatprep.subr.mxu0 0.0
    %134 = vmatpush1.xpose.msra.mxu0 0.0
    %135 = vmatprep.subr.mxu0 0.0
    %136 = vmatpush1.xpose.msra.mxu0 0.0
    %137 = vmatprep.subr.mxu0 0.0
    %138 = vmatpush1.xpose.msra.mxu0 0.0
    %139 = vmatprep.subr.mxu0 0.0
    %140 = vmatpush1.xpose.msra.mxu0 0.0
    %141 = vmatprep.subr.mxu0 0.0
    %142 = vmatpush1.xpose.msra.mxu0 0.0
    %143 = vmatprep.subr.mxu0 0.0
    %144 = vmatpush1.xpose.msra.mxu0 0.0
    %145 = vmatprep.subr.mxu0 0.0
    %146 = vmatpush1.xpose.msra.mxu0 0.0
    %147 = vmatprep.subr.mxu0 0.0
    %148 = vmatpush1.xpose.msra.mxu0 0.0
    %149 = vmatprep.subr.mxu0 0.0
    %150 = vmatpush1.xpose.msra.mxu0 0.0
    %151 = vmatprep.subr.mxu0 0.0
    %152 = vmatpush1.xpose.msra.mxu0 0.0
    %153 = vmatprep.subr.mxu0 0.0
    %154 = vmatpush1.xpose.msra.mxu0 0.0
    %155 = vmatprep.subr.mxu0 0.0
    %156 = vmatpush1.xpose.msra.mxu0 0.0
    %157 = vmatprep.subr.mxu0 0.0
    %158 = vmatpush1.xpose.msra.mxu0 0.0
    %159 = vmatprep.subr.mxu0 0.0
    %160 = vmatpush1.xpose.msra.mxu0 0.0
    %161 = vmatprep.subr.mxu0 0.0
    %162 = vmatpush1.xpose.msra.mxu0 0.0
    %163 = vmatprep.subr.mxu0 0.0
    %164 = vmatpush1.xpose.msra.mxu0 0.0
    %165 = vmatprep.mubr.f32.mxu0 0.0
    %166 = vmatmul.mubr.f32.gmra.mrb[0].mxu0 %v90
    %v167 = vpop.f32.mrb[0].mxu0
    %v168 = vadd.f32 0.0, %v167
    %v169 = vpop.f32.mrb[0].mxu0
    %170 = vmatprep.mubr.f32.mxu0 0.0
    %171 = vmatmul.mubr.f32.gmra.mrb[0].mxu0 %v93
    %v172 = vpop.f32.mrb[0].mxu0
    %v173 = vadd.f32 0.0, %v172
    %v174 = vpop.f32.mrb[0].mxu0
    %175 = vdwg.mxu0
    %v177 = vsel %vm88, %v82, 0
    %v180 = vsel %vm88, %v83, 0
    %v183 = vsel %vm88, %v66, 0
    %v186 = vsel %vm88, %v67, 0
    %188 = vmatprep.subr.mxu0 0.0
    %189 = vmatpush1.xpose.msra.mxu0 %v183
    %190 = vmatprep.subr.mxu0 0.0
    %191 = vmatpush1.xpose.msra.mxu0 %v186
    %192 = vmatprep.subr.mxu0 0.0
    %193 = vmatpush1.xpose.msra.mxu0 0.0
    %194 = vmatprep.subr.mxu0 0.0
    %195 = vmatpush1.xpose.msra.mxu0 0.0
    %196 = vmatprep.subr.mxu0 0.0
    %197 = vmatpush1.xpose.msra.mxu0 0.0
    %198 = vmatprep.subr.mxu0 0.0
    %199 = vmatpush1.xpose.msra.mxu0 0.0
    %200 = vmatprep.subr.mxu0 0.0
    %201 = vmatpush1.xpose.msra.mxu0 0.0
    %202 = vmatprep.subr.mxu0 0.0
    %203 = vmatpush1.xpose.msra.mxu0 0.0
    %204 = vmatprep.subr.mxu0 0.0
    %205 = vmatpush1.xpose.msra.mxu0 0.0
    %206 = vmatprep.subr.mxu0 0.0
    %207 = vmatpush1.xpose.msra.mxu0 0.0
    %208 = vmatprep.subr.mxu0 0.0
    %209 = vmatpush1.xpose.msra.mxu0 0.0
    %210 = vmatprep.subr.mxu0 0.0
    %211 = vmatpush1.xpose.msra.mxu0 0.0
    %212 = vmatprep.subr.mxu0 0.0
    %213 = vmatpush1.xpose.msra.mxu0 0.0
    %214 = vmatprep.subr.mxu0 0.0
    %215 = vmatpush1.xpose.msra.mxu0 0.0
    %216 = vmatprep.subr.mxu0 0.0
    %217 = vmatpush1.xpose.msra.mxu0 0.0
    %218 = vmatprep.subr.mxu0 0.0
    %219 = vmatpush1.xpose.msra.mxu0 0.0
    %220 = vmatprep.subr.mxu0 0.0
    %221 = vmatpush1.xpose.msra.mxu0 0.0
    %222 = vmatprep.subr.mxu0 0.0
    %223 = vmatpush1.xpose.msra.mxu0 0.0
    %224 = vmatprep.subr.mxu0 0.0
    %225 = vmatpush1.xpose.msra.mxu0 0.0
    %226 = vmatprep.subr.mxu0 0.0
    %227 = vmatpush1.xpose.msra.mxu0 0.0
    %228 = vmatprep.subr.mxu0 0.0
    %229 = vmatpush1.xpose.msra.mxu0 0.0
    %230 = vmatprep.subr.mxu0 0.0
    %231 = vmatpush1.xpose.msra.mxu0 0.0
    %232 = vmatprep.subr.mxu0 0.0
    %233 = vmatpush1.xpose.msra.mxu0 0.0
    %234 = vmatprep.subr.mxu0 0.0
    %235 = vmatpush1.xpose.msra.mxu0 0.0
    %236 = vmatprep.subr.mxu0 0.0
    %237 = vmatpush1.xpose.msra.mxu0 0.0
    %238 = vmatprep.subr.mxu0 0.0
    %239 = vmatpush1.xpose.msra.mxu0 0.0
    %240 = vmatprep.subr.mxu0 0.0
    %241 = vmatpush1.xpose.msra.mxu0 0.0
    %242 = vmatprep.subr.mxu0 0.0
    %243 = vmatpush1.xpose.msra.mxu0 0.0
    %244 = vmatprep.subr.mxu0 0.0
    %245 = vmatpush1.xpose.msra.mxu0 0.0
    %246 = vmatprep.subr.mxu0 0.0
    %247 = vmatpush1.xpose.msra.mxu0 0.0
    %248 = vmatprep.subr.mxu0 0.0
    %249 = vmatpush1.xpose.msra.mxu0 0.0
    %250 = vmatprep.subr.mxu0 0.0
    %251 = vmatpush1.xpose.msra.mxu0 0.0
    %252 = vmatprep.mubr.f32.mxu0 0.0
    %253 = vmatmul.mubr.f32.gmra.mrb[0].mxu0 %v177
    %v254 = vpop.f32.mrb[0].mxu0
    %v255 = vadd.f32 0.0, %v254
    %v256 = vpop.f32.mrb[0].mxu0
    %257 = vmatprep.mubr.f32.mxu0 0.0
    %258 = vmatmul.mubr.f32.gmra.mrb[0].mxu0 %v180
    %v259 = vpop.f32.mrb[0].mxu0
    %v260 = vadd.f32 0.0, %v259
    %v261 = vpop.f32.mrb[0].mxu0
    %262 = vdwg.mxu0
    %v264 = vsel %vm88, %v84, 0
    %v267 = vsel %vm88, %v85, 0
    %v270 = vsel %vm88, %v68, 0
    %v273 = vsel %vm88, %v69, 0
    %275 = vmatprep.subr.mxu0 0.0
    %276 = vmatpush1.xpose.msra.mxu0 %v270
    %277 = vmatprep.subr.mxu0 0.0
    %278 = vmatpush1.xpose.msra.mxu0 %v273
    %279 = vmatprep.subr.mxu0 0.0
    %280 = vmatpush1.xpose.msra.mxu0 0.0
    %281 = vmatprep.subr.mxu0 0.0
    %282 = vmatpush1.xpose.msra.mxu0 0.0
    %283 = vmatprep.subr.mxu0 0.0
    %284 = vmatpush1.xpose.msra.mxu0 0.0
    %285 = vmatprep.subr.mxu0 0.0
    %286 = vmatpush1.xpose.msra.mxu0 0.0
    %287 = vmatprep.subr.mxu0 0.0
    %288 = vmatpush1.xpose.msra.mxu0 0.0
    %289 = vmatprep.subr.mxu0 0.0
    %290 = vmatpush1.xpose.msra.mxu0 0.0
    %291 = vmatprep.subr.mxu0 0.0
    %292 = vmatpush1.xpose.msra.mxu0 0.0
    %293 = vmatprep.subr.mxu0 0.0
    %294 = vmatpush1.xpose.msra.mxu0 0.0
    %295 = vmatprep.subr.mxu0 0.0
    %296 = vmatpush1.xpose.msra.mxu0 0.0
    %297 = vmatprep.subr.mxu0 0.0
    %298 = vmatpush1.xpose.msra.mxu0 0.0
    %299 = vmatprep.subr.mxu0 0.0
    %300 = vmatpush1.xpose.msra.mxu0 0.0
    %301 = vmatprep.subr.mxu0 0.0
    %302 = vmatpush1.xpose.msra.mxu0 0.0
    %303 = vmatprep.subr.mxu0 0.0
    %304 = vmatpush1.xpose.msra.mxu0 0.0
    %305 = vmatprep.subr.mxu0 0.0
    %306 = vmatpush1.xpose.msra.mxu0 0.0
    %307 = vmatprep.subr.mxu0 0.0
    %308 = vmatpush1.xpose.msra.mxu0 0.0
    %309 = vmatprep.subr.mxu0 0.0
    %310 = vmatpush1.xpose.msra.mxu0 0.0
    %311 = vmatprep.subr.mxu0 0.0
    %312 = vmatpush1.xpose.msra.mxu0 0.0
    %313 = vmatprep.subr.mxu0 0.0
    %314 = vmatpush1.xpose.msra.mxu0 0.0
    %315 = vmatprep.subr.mxu0 0.0
    %316 = vmatpush1.xpose.msra.mxu0 0.0
    %317 = vmatprep.subr.mxu0 0.0
    %318 = vmatpush1.xpose.msra.mxu0 0.0
    %319 = vmatprep.subr.mxu0 0.0
    %320 = vmatpush1.xpose.msra.mxu0 0.0
    %321 = vmatprep.subr.mxu0 0.0
    %322 = vmatpush1.xpose.msra.mxu0 0.0
    %323 = vmatprep.subr.mxu0 0.0
    %324 = vmatpush1.xpose.msra.mxu0 0.0
    %325 = vmatprep.subr.mxu0 0.0
    %326 = vmatpush1.xpose.msra.mxu0 0.0
    %327 = vmatprep.subr.mxu0 0.0
    %328 = vmatpush1.xpose.msra.mxu0 0.0
    %329 = vmatprep.subr.mxu0 0.0
    %330 = vmatpush1.xpose.msra.mxu0 0.0
    %331 = vmatprep.subr.mxu0 0.0
    %332 = vmatpush1.xpose.msra.mxu0 0.0
    %333 = vmatprep.subr.mxu0 0.0
    %334 = vmatpush1.xpose.msra.mxu0 0.0
    %335 = vmatprep.subr.mxu0 0.0
    %336 = vmatpush1.xpose.msra.mxu0 0.0
    %337 = vmatprep.subr.mxu0 0.0
    %338 = vmatpush1.xpose.msra.mxu0 0.0
    %339 = vmatprep.mubr.f32.mxu0 0.0
    %340 = vmatmul.mubr.f32.gmra.mrb[0].mxu0 %v264
    %v341 = vpop.f32.mrb[0].mxu0
    %v342 = vadd.f32 0.0, %v341
    %v343 = vpop.f32.mrb[0].mxu0
    %344 = vmatprep.mubr.f32.mxu0 0.0
    %345 = vmatmul.mubr.f32.gmra.mrb[0].mxu0 %v267
    %v346 = vpop.f32.mrb[0].mxu0
    %v347 = vadd.f32 0.0, %v346
    %v348 = vpop.f32.mrb[0].mxu0
    %349 = vdwg.mxu0
    %v351 = vsel %vm88, %v86, 0
    %v354 = vsel %vm88, %v87, 0
    %v357 = vsel %vm88, %v70, 0
    %v360 = vsel %vm88, %v71, 0
    %362 = vmatprep.subr.mxu0 0.0
    %363 = vmatpush1.xpose.msra.mxu0 %v357
    %364 = vmatprep.subr.mxu0 0.0
    %365 = vmatpush1.xpose.msra.mxu0 %v360
    %366 = vmatprep.subr.mxu0 0.0
    %367 = vmatpush1.xpose.msra.mxu0 0.0
    %368 = vmatprep.subr.mxu0 0.0
    %369 = vmatpush1.xpose.msra.mxu0 0.0
    %370 = vmatprep.subr.mxu0 0.0
    %371 = vmatpush1.xpose.msra.mxu0 0.0
    %372 = vmatprep.subr.mxu0 0.0
    %373 = vmatpush1.xpose.msra.mxu0 0.0
    %374 = vmatprep.subr.mxu0 0.0
    %375 = vmatpush1.xpose.msra.mxu0 0.0
    %376 = vmatprep.subr.mxu0 0.0
    %377 = vmatpush1.xpose.msra.mxu0 0.0
    %378 = vmatprep.subr.mxu0 0.0
    %379 = vmatpush1.xpose.msra.mxu0 0.0
    %380 = vmatprep.subr.mxu0 0.0
    %381 = vmatpush1.xpose.msra.mxu0 0.0
    %382 = vmatprep.subr.mxu0 0.0
    %383 = vmatpush1.xpose.msra.mxu0 0.0
    %384 = vmatprep.subr.mxu0 0.0
    %385 = vmatpush1.xpose.msra.mxu0 0.0
    %386 = vmatprep.subr.mxu0 0.0
    %387 = vmatpush1.xpose.msra.mxu0 0.0
    %388 = vmatprep.subr.mxu0 0.0
    %389 = vmatpush1.xpose.msra.mxu0 0.0
    %390 = vmatprep.subr.mxu0 0.0
    %391 = vmatpush1.xpose.msra.mxu0 0.0
    %392 = vmatprep.subr.mxu0 0.0
    %393 = vmatpush1.xpose.msra.mxu0 0.0
    %394 = vmatprep.subr.mxu0 0.0
    %395 = vmatpush1.xpose.msra.mxu0 0.0
    %396 = vmatprep.subr.mxu0 0.0
    %397 = vmatpush1.xpose.msra.mxu0 0.0
    %398 = vmatprep.subr.mxu0 0.0
    %399 = vmatpush1.xpose.msra.mxu0 0.0
    %400 = vmatprep.subr.mxu0 0.0
    %401 = vmatpush1.xpose.msra.mxu0 0.0
    %402 = vmatprep.subr.mxu0 0.0
    %403 = vmatpush1.xpose.msra.mxu0 0.0
    %404 = vmatprep.subr.mxu0 0.0
    %405 = vmatpush1.xpose.msra.mxu0 0.0
    %406 = vmatprep.subr.mxu0 0.0
    %407 = vmatpush1.xpose.msra.mxu0 0.0
    %408 = vmatprep.subr.mxu0 0.0
    %409 = vmatpush1.xpose.msra.mxu0 0.0
    %410 = vmatprep.subr.mxu0 0.0
    %411 = vmatpush1.xpose.msra.mxu0 0.0
    %412 = vmatprep.subr.mxu0 0.0
    %413 = vmatpush1.xpose.msra.mxu0 0.0
    %414 = vmatprep.subr.mxu0 0.0
    %415 = vmatpush1.xpose.msra.mxu0 0.0
    %416 = vmatprep.subr.mxu0 0.0
    %417 = vmatpush1.xpose.msra.mxu0 0.0
    %418 = vmatprep.subr.mxu0 0.0
    %419 = vmatpush1.xpose.msra.mxu0 0.0
    %420 = vmatprep.subr.mxu0 0.0
    %421 = vmatpush1.xpose.msra.mxu0 0.0
    %422 = vmatprep.subr.mxu0 0.0
    %423 = vmatpush1.xpose.msra.mxu0 0.0
    %424 = vmatprep.subr.mxu0 0.0
    %425 = vmatpush1.xpose.msra.mxu0 0.0
    %426 = vmatprep.mubr.f32.mxu0 0.0
    %427 = vmatmul.mubr.f32.gmra.mrb[0].mxu0 %v351
    %v428 = vpop.f32.mrb[0].mxu0
    %v429 = vadd.f32 0.0, %v428
    %v430 = vpop.f32.mrb[0].mxu0
    %431 = vmatprep.mubr.f32.mxu0 0.0
    %432 = vmatmul.mubr.f32.gmra.mrb[0].mxu0 %v354
    %v433 = vpop.f32.mrb[0].mxu0
    %v434 = vadd.f32 0.0, %v433
    %v435 = vpop.f32.mrb[0].mxu0
    %436 = vdwg.mxu0
    %vm437 = vcmask 130048
    %v438 = vsel %vm437, %v168, -inf
    %439 = vmax.xlane.f32.xlu0 %v438
    %v440 = vpop.xlane.xlu0 %439
    %v441 = vsel %vm437, %v173, -inf
    %442 = vmax.xlane.f32.xlu0 %v441
    %v443 = vpop.xlane.xlu0 %442
    %v444 = vsel %vm437, %v255, -inf
    %445 = vmax.xlane.f32.xlu0 %v444
    %v446 = vpop.xlane.xlu0 %445
    %v447 = vsel %vm437, %v260, -inf
    %448 = vmax.xlane.f32.xlu0 %v447
    %v449 = vpop.xlane.xlu0 %448
    %v450 = vsel %vm437, %v342, -inf
    %451 = vmax.xlane.f32.xlu0 %v450
    %v452 = vpop.xlane.xlu0 %451
    %v453 = vsel %vm437, %v347, -inf
    %454 = vmax.xlane.f32.xlu0 %v453
    %v455 = vpop.xlane.xlu0 %454
    %v456 = vsel %vm437, %v429, -inf
    %457 = vmax.xlane.f32.xlu0 %v456
    %v458 = vpop.xlane.xlu0 %457
    %v459 = vsel %vm437, %v434, -inf
    %460 = vmax.xlane.f32.xlu0 %v459
    %v461 = vpop.xlane.xlu0 %460
    %v462 = vsub.f32 %v168, %v440
    %v463 = vsub.f32 %v173, %v443
    %v464 = vsub.f32 %v255, %v446
    %v465 = vsub.f32 %v260, %v449
    %v466 = vsub.f32 %v342, %v452
    %v467 = vsub.f32 %v347, %v455
    %v468 = vsub.f32 %v429, %v458
    %v469 = vsub.f32 %v434, %v461
    %v470 = vmul.f32 %v462, 1.442695
    %v471 = vpow.pop %v470
    %v472 = vmul.f32 %v463, 1.442695
    %v473 = vpow.pop %v472
    %v474 = vmul.f32 %v464, 1.442695
    %v475 = vpow.pop %v474
    %v476 = vmul.f32 %v465, 1.442695
    %v477 = vpow.pop %v476
    %v478 = vmul.f32 %v466, 1.442695
    %v479 = vpow.pop %v478
    %v480 = vmul.f32 %v467, 1.442695
    %v481 = vpow.pop %v480
    %v482 = vmul.f32 %v468, 1.442695
    %v483 = vpow.pop %v482
    %v484 = vmul.f32 %v469, 1.442695
    %v485 = vpow.pop %v484
    %v486 = vsel %vm437, %v471, 0.0
    %487 = vadd.xlane.f32.xlu0 %v486
    %v488 = vpop.xlane.xlu0 %487
    %v489 = vsel %vm437, %v473, 0.0
    %490 = vadd.xlane.f32.xlu0 %v489
    %v491 = vpop.xlane.xlu0 %490
    %v492 = vsel %vm437, %v475, 0.0
    %493 = vadd.xlane.f32.xlu0 %v492
    %v494 = vpop.xlane.xlu0 %493
    %v495 = vsel %vm437, %v477, 0.0
    %496 = vadd.xlane.f32.xlu0 %v495
    %v497 = vpop.xlane.xlu0 %496
    %v498 = vsel %vm437, %v479, 0.0
    %499 = vadd.xlane.f32.xlu0 %v498
    %v500 = vpop.xlane.xlu0 %499
    %v501 = vsel %vm437, %v481, 0.0
    %502 = vadd.xlane.f32.xlu0 %v501
    %v503 = vpop.xlane.xlu0 %502
    %v504 = vsel %vm437, %v483, 0.0
    %505 = vadd.xlane.f32.xlu0 %v504
    %v506 = vpop.xlane.xlu0 %505
    %v507 = vsel %vm437, %v485, 0.0
    %508 = vadd.xlane.f32.xlu0 %v507
    %v509 = vpop.xlane.xlu0 %508
    %v510 = vrcp.pop %v488
    %v511 = vmul.f32 1.0, %v510
    %v512 = vrcp.pop %v491
    %v513 = vmul.f32 1.0, %v512
    %v514 = vrcp.pop %v494
    %v515 = vmul.f32 1.0, %v514
    %v516 = vrcp.pop %v497
    %v517 = vmul.f32 1.0, %v516
    %v518 = vrcp.pop %v500
    %v519 = vmul.f32 1.0, %v518
    %v520 = vrcp.pop %v503
    %v521 = vmul.f32 1.0, %v520
    %v522 = vrcp.pop %v506
    %v523 = vmul.f32 1.0, %v522
    %v524 = vrcp.pop %v509
    %v525 = vmul.f32 1.0, %v524
    %v526 = vmul.f32 %v471, %v511
    %v527 = vmul.f32 %v473, %v513
    %v528 = vmul.f32 %v475, %v515
    %v529 = vmul.f32 %v477, %v517
    %v530 = vmul.f32 %v479, %v519
    %v531 = vmul.f32 %v481, %v521
    %v532 = vmul.f32 %v483, %v523
    %v533 = vmul.f32 %v485, %v525
    %v535 = vsel %vm437, %v526, 0
    %v538 = vsel %vm437, %v527, 0
    %540 = vmatprep.subr.mxu0 0.0
    %541 = vmatpush1.msra.mxu0 %v72
    %542 = vmatprep.subr.mxu0 0.0
    %543 = vmatpush1.msra.mxu0 %v73
    %544 = vmatprep.subr.mxu0 0.0
    %545 = vmatpush1.msra.mxu0 0.0
    %546 = vmatprep.subr.mxu0 0.0
    %547 = vmatpush1.msra.mxu0 0.0
    %548 = vmatprep.subr.mxu0 0.0
    %549 = vmatpush1.msra.mxu0 0.0
    %550 = vmatprep.subr.mxu0 0.0
    %551 = vmatpush1.msra.mxu0 0.0
    %552 = vmatprep.subr.mxu0 0.0
    %553 = vmatpush1.msra.mxu0 0.0
    %554 = vmatprep.subr.mxu0 0.0
    %555 = vmatpush1.msra.mxu0 0.0
    %556 = vmatprep.subr.mxu0 0.0
    %557 = vmatpush1.msra.mxu0 0.0
    %558 = vmatprep.subr.mxu0 0.0
    %559 = vmatpush1.msra.mxu0 0.0
    %560 = vmatprep.subr.mxu0 0.0
    %561 = vmatpush1.msra.mxu0 0.0
    %562 = vmatprep.subr.mxu0 0.0
    %563 = vmatpush1.msra.mxu0 0.0
    %564 = vmatprep.subr.mxu0 0.0
    %565 = vmatpush1.msra.mxu0 0.0
    %566 = vmatprep.subr.mxu0 0.0
    %567 = vmatpush1.msra.mxu0 0.0
    %568 = vmatprep.subr.mxu0 0.0
    %569 = vmatpush1.msra.mxu0 0.0
    %570 = vmatprep.subr.mxu0 0.0
    %571 = vmatpush1.msra.mxu0 0.0
    %572 = vmatprep.subr.mxu0 0.0
    %573 = vmatpush1.msra.mxu0 0.0
    %574 = vmatprep.subr.mxu0 0.0
    %575 = vmatpush1.msra.mxu0 0.0
    %576 = vmatprep.subr.mxu0 0.0
    %577 = vmatpush1.msra.mxu0 0.0
    %578 = vmatprep.subr.mxu0 0.0
    %579 = vmatpush1.msra.mxu0 0.0
    %580 = vmatprep.subr.mxu0 0.0
    %581 = vmatpush1.msra.mxu0 0.0
    %582 = vmatprep.subr.mxu0 0.0
    %583 = vmatpush1.msra.mxu0 0.0
    %584 = vmatprep.subr.mxu0 0.0
    %585 = vmatpush1.msra.mxu0 0.0
    %586 = vmatprep.subr.mxu0 0.0
    %587 = vmatpush1.msra.mxu0 0.0
    %588 = vmatprep.subr.mxu0 0.0
    %589 = vmatpush1.msra.mxu0 0.0
    %590 = vmatprep.subr.mxu0 0.0
    %591 = vmatpush1.msra.mxu0 0.0
    %592 = vmatprep.subr.mxu0 0.0
    %593 = vmatpush1.msra.mxu0 0.0
    %594 = vmatprep.subr.mxu0 0.0
    %595 = vmatpush1.msra.mxu0 0.0
    %596 = vmatprep.subr.mxu0 0.0
    %597 = vmatpush1.msra.mxu0 0.0
    %598 = vmatprep.subr.mxu0 0.0
    %599 = vmatpush1.msra.mxu0 0.0
    %600 = vmatprep.subr.mxu0 0.0
    %601 = vmatpush1.msra.mxu0 0.0
    %602 = vmatprep.subr.mxu0 0.0
    %603 = vmatpush1.msra.mxu0 0.0
    %604 = vmatprep.mubr.f32.mxu0 0.0
    %605 = vmatmul.mubr.f32.gmra.mrb[0].mxu0 %v535
    %v606 = vpop.f32.mrb[0].mxu0
    %v607 = vadd.f32 0.0, %v606
    %v608 = vpop.f32.mrb[0].mxu0
    %609 = vmatprep.mubr.f32.mxu0 0.0
    %610 = vmatmul.mubr.f32.gmra.mrb[0].mxu0 %v538
    %v611 = vpop.f32.mrb[0].mxu0
    %v612 = vadd.f32 0.0, %v611
    %v613 = vpop.f32.mrb[0].mxu0
    %614 = vdwg.mxu0
    %v616 = vsel %vm437, %v528, 0
    %v619 = vsel %vm437, %v529, 0
    %621 = vmatprep.subr.mxu0 0.0
    %622 = vmatpush1.msra.mxu0 %v74
    %623 = vmatprep.subr.mxu0 0.0
    %624 = vmatpush1.msra.mxu0 %v75
    %625 = vmatprep.subr.mxu0 0.0
    %626 = vmatpush1.msra.mxu0 0.0
    %627 = vmatprep.subr.mxu0 0.0
    %628 = vmatpush1.msra.mxu0 0.0
    %629 = vmatprep.subr.mxu0 0.0
    %630 = vmatpush1.msra.mxu0 0.0
    %631 = vmatprep.subr.mxu0 0.0
    %632 = vmatpush1.msra.mxu0 0.0
    %633 = vmatprep.subr.mxu0 0.0
    %634 = vmatpush1.msra.mxu0 0.0
    %635 = vmatprep.subr.mxu0 0.0
    %636 = vmatpush1.msra.mxu0 0.0
    %637 = vmatprep.subr.mxu0 0.0
    %638 = vmatpush1.msra.mxu0 0.0
    %639 = vmatprep.subr.mxu0 0.0
    %640 = vmatpush1.msra.mxu0 0.0
    %641 = vmatprep.subr.mxu0 0.0
    %642 = vmatpush1.msra.mxu0 0.0
    %643 = vmatprep.subr.mxu0 0.0
    %644 = vmatpush1.msra.mxu0 0.0
    %645 = vmatprep.subr.mxu0 0.0
    %646 = vmatpush1.msra.mxu0 0.0
    %647 = vmatprep.subr.mxu0 0.0
    %648 = vmatpush1.msra.mxu0 0.0
    %649 = vmatprep.subr.mxu0 0.0
    %650 = vmatpush1.msra.mxu0 0.0
    %651 = vmatprep.subr.mxu0 0.0
    %652 = vmatpush1.msra.mxu0 0.0
    %653 = vmatprep.subr.mxu0 0.0
    %654 = vmatpush1.msra.mxu0 0.0
    %655 = vmatprep.subr.mxu0 0.0
    %656 = vmatpush1.msra.mxu0 0.0
    %657 = vmatprep.subr.mxu0 0.0
    %658 = vmatpush1.msra.mxu0 0.0
    %659 = vmatprep.subr.mxu0 0.0
    %660 = vmatpush1.msra.mxu0 0.0
    %661 = vmatprep.subr.mxu0 0.0
    %662 = vmatpush1.msra.mxu0 0.0
    %663 = vmatprep.subr.mxu0 0.0
    %664 = vmatpush1.msra.mxu0 0.0
    %665 = vmatprep.subr.mxu0 0.0
    %666 = vmatpush1.msra.mxu0 0.0
    %667 = vmatprep.subr.mxu0 0.0
    %668 = vmatpush1.msra.mxu0 0.0
    %669 = vmatprep.subr.mxu0 0.0
    %670 = vmatpush1.msra.mxu0 0.0
    %671 = vmatprep.subr.mxu0 0.0
    %672 = vmatpush1.msra.mxu0 0.0
    %673 = vmatprep.subr.mxu0 0.0
    %674 = vmatpush1.msra.mxu0 0.0
    %675 = vmatprep.subr.mxu0 0.0
    %676 = vmatpush1.msra.mxu0 0.0
    %677 = vmatprep.subr.mxu0 0.0
    %678 = vmatpush1.msra.mxu0 0.0
    %679 = vmatprep.subr.mxu0 0.0
    %680 = vmatpush1.msra.mxu0 0.0
    %681 = vmatprep.subr.mxu0 0.0
    %682 = vmatpush1.msra.mxu0 0.0
    %683 = vmatprep.subr.mxu0 0.0
    %684 = vmatpush1.msra.mxu0 0.0
    %685 = vmatprep.mubr.f32.mxu0 0.0
    %686 = vmatmul.mubr.f32.gmra.mrb[0].mxu0 %v616
    %v687 = vpop.f32.mrb[0].mxu0
    %v688 = vadd.f32 0.0, %v687
    %v689 = vpop.f32.mrb[0].mxu0
    %690 = vmatprep.mubr.f32.mxu0 0.0
    %691 = vmatmul.mubr.f32.gmra.mrb[0].mxu0 %v619
    %v692 = vpop.f32.mrb[0].mxu0
    %v693 = vadd.f32 0.0, %v692
    %v694 = vpop.f32.mrb[0].mxu0
    %695 = vdwg.mxu0
    %v697 = vsel %vm437, %v530, 0
    %v700 = vsel %vm437, %v531, 0
    %702 = vmatprep.subr.mxu0 0.0
    %703 = vmatpush1.msra.mxu0 %v76
    %704 = vmatprep.subr.mxu0 0.0
    %705 = vmatpush1.msra.mxu0 %v77
    %706 = vmatprep.subr.mxu0 0.0
    %707 = vmatpush1.msra.mxu0 0.0
    %708 = vmatprep.subr.mxu0 0.0
    %709 = vmatpush1.msra.mxu0 0.0
    %710 = vmatprep.subr.mxu0 0.0
    %711 = vmatpush1.msra.mxu0 0.0
    %712 = vmatprep.subr.mxu0 0.0
    %713 = vmatpush1.msra.mxu0 0.0
    %714 = vmatprep.subr.mxu0 0.0
    %715 = vmatpush1.msra.mxu0 0.0
    %716 = vmatprep.subr.mxu0 0.0
    %717 = vmatpush1.msra.mxu0 0.0
    %718 = vmatprep.subr.mxu0 0.0
    %719 = vmatpush1.msra.mxu0 0.0
    %720 = vmatprep.subr.mxu0 0.0
    %721 = vmatpush1.msra.mxu0 0.0
    %722 = vmatprep.subr.mxu0 0.0
    %723 = vmatpush1.msra.mxu0 0.0
    %724 = vmatprep.subr.mxu0 0.0
    %725 = vmatpush1.msra.mxu0 0.0
    %726 = vmatprep.subr.mxu0 0.0
    %727 = vmatpush1.msra.mxu0 0.0
    %728 = vmatprep.subr.mxu0 0.0
    %729 = vmatpush1.msra.mxu0 0.0
    %730 = vmatprep.subr.mxu0 0.0
    %731 = vmatpush1.msra.mxu0 0.0
    %732 = vmatprep.subr.mxu0 0.0
    %733 = vmatpush1.msra.mxu0 0.0
    %734 = vmatprep.subr.mxu0 0.0
    %735 = vmatpush1.msra.mxu0 0.0
    %736 = vmatprep.subr.mxu0 0.0
    %737 = vmatpush1.msra.mxu0 0.0
    %738 = vmatprep.subr.mxu0 0.0
    %739 = vmatpush1.msra.mxu0 0.0
    %740 = vmatprep.subr.mxu0 0.0
    %741 = vmatpush1.msra.mxu0 0.0
    %742 = vmatprep.subr.mxu0 0.0
    %743 = vmatpush1.msra.mxu0 0.0
    %744 = vmatprep.subr.mxu0 0.0
    %745 = vmatpush1.msra.mxu0 0.0
    %746 = vmatprep.subr.mxu0 0.0
    %747 = vmatpush1.msra.mxu0 0.0
    %748 = vmatprep.subr.mxu0 0.0
    %749 = vmatpush1.msra.mxu0 0.0
    %750 = vmatprep.subr.mxu0 0.0
    %751 = vmatpush1.msra.mxu0 0.0
    %752 = vmatprep.subr.mxu0 0.0
    %753 = vmatpush1.msra.mxu0 0.0
    %754 = vmatprep.subr.mxu0 0.0
    %755 = vmatpush1.msra.mxu0 0.0
    %756 = vmatprep.subr.mxu0 0.0
    %757 = vmatpush1.msra.mxu0 0.0
    %758 = vmatprep.subr.mxu0 0.0
    %759 = vmatpush1.msra.mxu0 0.0
    %760 = vmatprep.subr.mxu0 0.0
    %761 = vmatpush1.msra.mxu0 0.0
    %762 = vmatprep.subr.mxu0 0.0
    %763 = vmatpush1.msra.mxu0 0.0
    %764 = vmatprep.subr.mxu0 0.0
    %765 = vmatpush1.msra.mxu0 0.0
    %766 = vmatprep.mubr.f32.mxu0 0.0
    %767 = vmatmul.mubr.f32.gmra.mrb[0].mxu0 %v697
    %v768 = vpop.f32.mrb[0].mxu0
    %v769 = vadd.f32 0.0, %v768
    %v770 = vpop.f32.mrb[0].mxu0
    %771 = vmatprep.mubr.f32.mxu0 0.0
    %772 = vmatmul.mubr.f32.gmra.mrb[0].mxu0 %v700
    %v773 = vpop.f32.mrb[0].mxu0
    %v774 = vadd.f32 0.0, %v773
    %v775 = vpop.f32.mrb[0].mxu0
    %776 = vdwg.mxu0
    %v778 = vsel %vm437, %v532, 0
    %v781 = vsel %vm437, %v533, 0
    %783 = vmatprep.subr.mxu0 0.0
    %784 = vmatpush1.msra.mxu0 %v78
    %785 = vmatprep.subr.mxu0 0.0
    %786 = vmatpush1.msra.mxu0 %v79
    %787 = vmatprep.subr.mxu0 0.0
    %788 = vmatpush1.msra.mxu0 0.0
    %789 = vmatprep.subr.mxu0 0.0
    %790 = vmatpush1.msra.mxu0 0.0
    %791 = vmatprep.subr.mxu0 0.0
    %792 = vmatpush1.msra.mxu0 0.0
    %793 = vmatprep.subr.mxu0 0.0
    %794 = vmatpush1.msra.mxu0 0.0
    %795 = vmatprep.subr.mxu0 0.0
    %796 = vmatpush1.msra.mxu0 0.0
    %797 = vmatprep.subr.mxu0 0.0
    %798 = vmatpush1.msra.mxu0 0.0
    %799 = vmatprep.subr.mxu0 0.0
    %800 = vmatpush1.msra.mxu0 0.0
    %801 = vmatprep.subr.mxu0 0.0
    %802 = vmatpush1.msra.mxu0 0.0
    %803 = vmatprep.subr.mxu0 0.0
    %804 = vmatpush1.msra.mxu0 0.0
    %805 = vmatprep.subr.mxu0 0.0
    %806 = vmatpush1.msra.mxu0 0.0
    %807 = vmatprep.subr.mxu0 0.0
    %808 = vmatpush1.msra.mxu0 0.0
    %809 = vmatprep.subr.mxu0 0.0
    %810 = vmatpush1.msra.mxu0 0.0
    %811 = vmatprep.subr.mxu0 0.0
    %812 = vmatpush1.msra.mxu0 0.0
    %813 = vmatprep.subr.mxu0 0.0
    %814 = vmatpush1.msra.mxu0 0.0
    %815 = vmatprep.subr.mxu0 0.0
    %816 = vmatpush1.msra.mxu0 0.0
    %817 = vmatprep.subr.mxu0 0.0
    %818 = vmatpush1.msra.mxu0 0.0
    %819 = vmatprep.subr.mxu0 0.0
    %820 = vmatpush1.msra.mxu0 0.0
    %821 = vmatprep.subr.mxu0 0.0
    %822 = vmatpush1.msra.mxu0 0.0
    %823 = vmatprep.subr.mxu0 0.0
    %824 = vmatpush1.msra.mxu0 0.0
    %825 = vmatprep.subr.mxu0 0.0
    %826 = vmatpush1.msra.mxu0 0.0
    %827 = vmatprep.subr.mxu0 0.0
    %828 = vmatpush1.msra.mxu0 0.0
    %829 = vmatprep.subr.mxu0 0.0
    %830 = vmatpush1.msra.mxu0 0.0
    %831 = vmatprep.subr.mxu0 0.0
    %832 = vmatpush1.msra.mxu0 0.0
    %833 = vmatprep.subr.mxu0 0.0
    %834 = vmatpush1.msra.mxu0 0.0
    %835 = vmatprep.subr.mxu0 0.0
    %836 = vmatpush1.msra.mxu0 0.0
    %837 = vmatprep.subr.mxu0 0.0
    %838 = vmatpush1.msra.mxu0 0.0
    %839 = vmatprep.subr.mxu0 0.0
    %840 = vmatpush1.msra.mxu0 0.0
    %841 = vmatprep.subr.mxu0 0.0
    %842 = vmatpush1.msra.mxu0 0.0
    %843 = vmatprep.subr.mxu0 0.0
    %844 = vmatpush1.msra.mxu0 0.0
    %845 = vmatprep.subr.mxu0 0.0
    %846 = vmatpush1.msra.mxu0 0.0
    %847 = vmatprep.mubr.f32.mxu0 0.0
    %848 = vmatmul.mubr.f32.gmra.mrb[0].mxu0 %v778
    %v849 = vpop.f32.mrb[0].mxu0
    %v850 = vadd.f32 0.0, %v849
    %v851 = vpop.f32.mrb[0].mxu0
    %852 = vmatprep.mubr.f32.mxu0 0.0
    %853 = vmatmul.mubr.f32.gmra.mrb[0].mxu0 %v781
    %v854 = vpop.f32.mrb[0].mxu0
    %v855 = vadd.f32 0.0, %v854
    %v856 = vpop.f32.mrb[0].mxu0
    %857 = vdwg.mxu0
    %858 = vst.msk [vmem:[#allocation8] sm:$0xff] %vm88, %v607
    %859 = vst.msk [vmem:[#allocation8 + $0x8] sm:$0xff] %vm88, %v612
    %860 = vst.msk [vmem:[#allocation8 + $0x10] sm:$0xff] %vm88, %v688
    %861 = vst.msk [vmem:[#allocation8 + $0x18] sm:$0xff] %vm88, %v693
    %862 = vst.msk [vmem:[#allocation8 + $0x20] sm:$0xff] %vm88, %v769
    %863 = vst.msk [vmem:[#allocation8 + $0x28] sm:$0xff] %vm88, %v774
    %864 = vst.msk [vmem:[#allocation8 + $0x30] sm:$0xff] %vm88, %v850
    %865 = vst.msk [vmem:[#allocation8 + $0x38] sm:$0xff] %vm88, %v855
    // Predicated region
    $region26: #{tpu_custom_call.1} parent=1 // pred_check
      _
    $region27: #{tpu_custom_call.1} parent=1 // pred_check_branch
      %867 = sbr.rel (0) target = $region29
    $region28: #{tpu_custom_call.1} parent=1 // pred_region
      %s869 = ssub.s32 1024, 1024
      %870 = vsyncadd [#allocation4], %s869
      %s871 = sshll.u32 [#allocation8], 4
      %s872 = int_to_ptr.vmem [resolvable:$true] %s871
      %877 = dma.vmem_to_hbm [thread:$0]  %s872, 1024, %s3, [#allocation4], 128, 128, 8
    $region29: #{tpu_custom_call.1} parent=1 // pred_fallthru
      _
    // Predicated region
    $region30: #{tpu_custom_call.1} parent=1 // pred_check
      _
    $region31: #{tpu_custom_call.1} parent=1 // pred_check_branch
      %879 = sbr.rel (0) target = $region33
    $region32: #{tpu_custom_call.1} parent=1 // pred_region
      %880 = dma.done [#allocation4], 1024
    $region33: #{tpu_custom_call.1} parent=1 // pred_fallthru
      _
    %881 = vsyncpa [#allocation3], 1
    %882 = vsyncpa [#allocation6], 1
    %883 = vsyncpa [#allocation4], 1

</llo_original>
